<compile_context>
chip_gen: v7x
topology: tpu7x:2x2x1
jax: 0.10.0
libtpu: 0.0.40
codegen_flags: <defaults>
</compile_context>

<pallas_src>
import functools

import jax
import jax.numpy as jnp
from jax import lax
from jax.experimental import pallas as pl
from jax.experimental.pallas import tpu as pltpu


def _round_up(x: int, m: int) -> int:
    return ((x + m - 1) // m) * m


def _default_vmem_budget() -> int:
    """VMEM budget with headroom for Mosaic internal scratch / pipeline state."""
    cap = 64 * 1024 * 1024
    try:
        cap = int(pltpu.get_tpu_info().vmem_capacity_bytes)
    except Exception:
        pass
    # v7x (64 MiB physical) -> ~56 MiB budget; v5e/v6e (128 MiB) -> ~112 MiB.
    return max(24 * 1024 * 1024, min(cap - 8 * 1024 * 1024, (cap * 7) // 8))


def _vmem_estimate(tm, tn, in_features, rank, in_itemsize, out_itemsize):
    """Lane/sublane-padded VMEM usage estimate (bytes) for the chosen tiles."""
    rank_l = _round_up(rank, 128)
    tn_l = _round_up(tn, 128)
    x_tile = 2 * tm * _round_up(in_features, 128) * in_itemsize   # double-buffered
    out_tile = 2 * tm * tn_l * out_itemsize                       # double-buffered
    a_buf = _round_up(in_features, 8) * rank_l * in_itemsize      # single-buffered
    b_tile = 2 * _round_up(rank, 8) * tn_l * in_itemsize          # double-buffered
    xa_scr = tm * rank_l * 4
    return x_tile + out_tile + a_buf + b_tile + xa_scr


def _lora_kernel(scaler_ref, x_ref, a_ref, b_ref, o_ref, xa_ref, *, precision):
    # grid = (i row tiles [parallel], j col tiles [arbitrary / sequential]).
    # x_ref : (tm, in_features)     a_ref : (in_features, rank)
    # b_ref : (rank, tn)            o_ref : (tm, tn)
    # xa_ref: (tm, rank) f32 scratch; persists across j for a fixed i.
    j = pl.program_id(1)

    @pl.when(j == 0)
    def _():
        xa = jnp.dot(
            x_ref[...],
            a_ref[...],
            preferred_element_type=jnp.float32,
            precision=precision,
        )
        # Fold the scaler here: scales (tm, rank) values instead of (tm, tn).
        xa_ref[...] = xa * scaler_ref[0]

    # Second matmul in the streaming dtype: native single-pass bf16 MXU when B
    # is bf16; the astype is a no-op for f32 B (precision keeps exact f32).
    out = jnp.dot(
        xa_ref[...].astype(b_ref.dtype),
        b_ref[...],
        preferred_element_type=jnp.float32,
        precision=precision,
    )
    o_ref[...] = out.astype(o_ref.dtype)


def lora_linear(
    x,
    A,
    B,
    scaler,
    *,
    tm=None,
    tn=None,
    stream_dtype=None,
    out_dtype=None,
    precision=None,
    vmem_budget_bytes=None,
):
    """x: (..., in_features) -> (..., out_features), computed as x @ A @ B * scaler."""
    in_features, rank = A.shape
    rank_b, out_features = B.shape
    assert rank == rank_b and x.shape[-1] == in_features

    lead_shape = x.shape[:-1]
    out_dtype = x.dtype if out_dtype is None else jnp.dtype(out_dtype)

    x2 = x.reshape(-1, in_features)
    M = x2.shape[0]

    # Optional narrow streaming dtype (bf16) for the mem-bound path.
    if stream_dtype is not None:
        x2 = x2.astype(stream_dtype)
        A = A.astype(stream_dtype)
        B = B.astype(stream_dtype)

    in_itemsize = jnp.dtype(x2.dtype).itemsize
    out_itemsize = jnp.dtype(out_dtype).itemsize
    sub = {4: 8, 2: 16, 1: 32}.get(in_itemsize, 8)   # native sublane multiple

    # f32 inputs: exact f32 MXU semantics (PyTorch parity) unless relaxed.
    if precision is None:
        precision = (
            lax.Precision.HIGHEST
            if jnp.dtype(x2.dtype) == jnp.float32
            else lax.Precision.DEFAULT
        )

    if vmem_budget_bytes is None:
        vmem_budget_bytes = _default_vmem_budget()

    # ---- N tiling: lane-dense when possible, no host pad/slice otherwise ----
    if tn is not None:
        N_pad = out_features if tn == out_features else _round_up(out_features, tn)
    elif out_features % 128 == 0:
        N_pad = out_features
        max_tn = 1024 if vmem_budget_bytes >= 80 * 1024 * 1024 else 512
        if N_pad <= max_tn:
            tn = N_pad
        else:
            tn = next(c for c in (max_tn, 512, 256, 128)
                      if c <= max_tn and N_pad % c == 0)
    elif out_features <= 2048:
        # Ragged but small N: single full-width tile -> no B pad, no out slice.
        N_pad = out_features
        tn = out_features
    else:
        # Ragged, large N: pad B's columns (tiny) and slice output columns back.
        N_pad = _round_up(out_features, 128)
        tn = next(c for c in (512, 256, 128) if N_pad % c == 0)
    assert N_pad % tn == 0 and (tn % 128 == 0 or tn == N_pad)
    if N_pad != out_features:
        B = jnp.pad(B, ((0, 0), (0, N_pad - out_features)))

    # ---- M tiling: big tiles, shrink to the VMEM budget, NO host padding ----
    if tm is None:
        if M <= 128:
            tm = _round_up(max(M, 1), sub)
        else:
            tm = min(512, _round_up(M, 128))
            while tm > 8 and _vmem_estimate(
                tm, tn, in_features, rank, in_itemsize, out_itemsize
            ) > vmem_budget_bytes:
                tm = max(8, tm // 2)
        # v7x has 2 TensorCores: give the "parallel" row axis >= 2 tiles so
        # both cores get work (one extra ~0.35us grid step on 1-TC chips).
        if pl.cdiv(M, tm) < 2 and M >= 2 * sub:
            tm = _round_up(pl.cdiv(M, 2), sub if M <= 256 else 128)
    tm = _round_up(tm, sub)

    need = _vmem_estimate(tm, tn, in_features, rank, in_itemsize, out_itemsize)
    if need > vmem_budget_bytes:
        # TODO(synk): add a K (in_features) grid axis with an f32 xa accumulator
        # so huge in_features degrades gracefully instead of erroring.
        raise ValueError(
            f"LoRA tiles need ~{need >> 20} MiB VMEM (budget "
            f"{vmem_budget_bytes >> 20} MiB); in_features={in_features} is too "
            "large for the untiled-K kernel."
        )
    vmem_limit = int(min(max(need * 5 // 4, 32 * 1024 * 1024), vmem_budget_bytes))

    scaler_arr = jnp.asarray([scaler], dtype=jnp.float32)
    grid = (pl.cdiv(M, tm), N_pad // tn)
    kernel = functools.partial(_lora_kernel, precision=precision)

    out = pl.pallas_call(
        kernel,
        out_shape=jax.ShapeDtypeStruct((M, N_pad), out_dtype),
        grid_spec=pltpu.PrefetchScalarGridSpec(
            num_scalar_prefetch=0,
            grid=grid,
            in_specs=[
                pl.BlockSpec(memory_space=pltpu.SMEM),                    # scaler
                pl.BlockSpec((tm, in_features), lambda i, j: (i, 0)),     # x row tile
                pl.BlockSpec((in_features, rank), lambda i, j: (0, 0),    # A (whole,
                             pipeline_mode=pl.Buffered(1)),               #  1 buffer)
                pl.BlockSpec((rank, tn), lambda i, j: (0, j)),            # B col tile
            ],
            out_specs=pl.BlockSpec((tm, tn), lambda i, j: (i, j)),
            scratch_shapes=[pltpu.VMEM((tm, rank), jnp.float32)],         # xa cache
        ),
        compiler_params=pltpu.CompilerParams(
            # j reuses the xa scratch written at j == 0 -> must stay "arbitrary"
            # (sequential); i is independent row tiles -> "parallel" (megacore).
            dimension_semantics=("parallel", "arbitrary"),
            vmem_limit_bytes=vmem_limit,
        ),
    )(scaler_arr, x2, A, B)

    if N_pad != out_features:
        out = out[:, :out_features]
    return out.reshape(*lead_shape, out_features)


if __name__ == "__main__":
    # Module hyperparameters (small, consistent with LoRALinear.__init__).
    in_features, out_features, rank, alpha = 32, 64, 4, 1.0
    batch, seq = 2, 8

    key = jax.random.PRNGKey(0)
    kx, kA, kB, kx2, kA2, kB2 = jax.random.split(key, 6)

    # reset_parameters(): A ~ N(0, 1), B = 0, scaler = alpha / rank.
    A = jax.random.normal(kA, (in_features, rank), dtype=jnp.float32)
    B0 = jnp.zeros((rank, out_features), dtype=jnp.float32)
    scaler = alpha / rank

    x = jax.random.normal(kx, (batch, seq, in_features), dtype=jnp.float32)

    def ref(x_, A_, B_, s_):
        xf = x_.reshape(-1, x_.shape[-1]).astype(jnp.float32)
        xa = jnp.matmul(xf, A_.astype(jnp.float32), precision=lax.Precision.HIGHEST)
        y = jnp.matmul(xa, B_.astype(jnp.float32), precision=lax.Precision.HIGHEST)
        return (y * s_).reshape(*x_.shape[:-1], B_.shape[-1])

    # 1) Init state (B == 0) — matches the PyTorch module right after __init__.
    y0 = jax.block_until_ready(lora_linear(x, A, B0, scaler))
    assert y0.shape == (batch, seq, out_features)
    assert jnp.allclose(y0, ref(x, A, B0, scaler), atol=1e-5, rtol=1e-5)

    # 2) Non-trivial B (as after some training) — exercises the real math path.
    B1 = 0.02 * jax.random.normal(kB, (rank, out_features), dtype=jnp.float32)
    y1 = jax.block_until_ready(lora_linear(x, A, B1, scaler))
    assert jnp.allclose(y1, ref(x, A, B1, scaler), atol=1e-5, rtol=1e-5)

    # 3) bf16 streaming + bf16 output (mem-bound perf mode) — loose tolerance.
    y1_bf16 = jax.block_until_ready(
        lora_linear(x, A, B1, scaler, stream_dtype=jnp.bfloat16,
                    out_dtype=jnp.bfloat16)
    )
    assert jnp.allclose(
        y1_bf16.astype(jnp.float32), ref(x, A, B1, scaler), atol=5e-2, rtol=5e-2
    )

    # 4) Ragged M (no host padding) + multiple N tiles (xa reuse across j > 0).
    in_f2, out_f2, rank2 = 32, 256, 4
    A2 = jax.random.normal(kA2, (in_f2, rank2), dtype=jnp.float32)
    B2 = 0.05 * jax.random.normal(kB2, (rank2, out_f2), dtype=jnp.float32)
    xr = jax.random.normal(kx2, (3, 5, in_f2), dtype=jnp.float32)   # M = 15
    y2 = jax.block_until_ready(lora_linear(xr, A2, B2, 0.25, tn=128))
    assert y2.shape == (3, 5, out_f2)
    assert jnp.allclose(y2, ref(xr, A2, B2, 0.25), atol=1e-5, rtol=1e-5)

    print("KERNEL_OK")
</pallas_src>

<mosaic_0001>
module attributes {stable_mosaic.version = 11 : i64} {
  func.func @_lora_kernel(%arg0: i32, %arg1: i32, %arg2: memref<1xf32, #tpu.memory_space<smem>>, %arg3: memref<8x32xf32, #tpu.memory_space<vmem>>, %arg4: memref<32x4xf32, #tpu.memory_space<vmem>>, %arg5: memref<4x64xf32, #tpu.memory_space<vmem>>, %arg6: memref<8x64xf32, #tpu.memory_space<vmem>>, %arg7: memref<8x4xf32, #tpu.memory_space<vmem>>) attributes {dimension_semantics = [#tpu.dimension_semantics<parallel>, #tpu.dimension_semantics<arbitrary>], iteration_bounds = array<i64: 2, 1>, scalar_prefetch = 0 : i64, scratch_operands = 1 : i64, tpu.core_type = #tpu.core_type<tc>, window_params = [{transform_indices = @transform_0, window_bounds = array<i64: 1>}, {transform_indices = @transform_1, window_bounds = array<i64: 8, 32>}, {pipeline_mode = #tpu.pipeline_mode<synchronous>, transform_indices = @transform_2, window_bounds = array<i64: 32, 4>}, {transform_indices = @transform_3, window_bounds = array<i64: 4, 64>}, {transform_indices = @transform_4, window_bounds = array<i64: 8, 64>}]} {
    %c0_i32 = arith.constant 0 : i32
    %0 = arith.cmpi eq, %arg1, %c0_i32 : i32
    %1 = arith.extui %0 : i1 to i32
    %c0_i32_0 = arith.constant 0 : i32
    %2 = arith.cmpi ne, %1, %c0_i32_0 : i32
    scf.if %2 {
      %c0_6 = arith.constant 0 : index
      %c0_7 = arith.constant 0 : index
      %7 = vector.load %arg3[%c0_6, %c0_7] : memref<8x32xf32, #tpu.memory_space<vmem>>, vector<8x32xf32>
      %c0_8 = arith.constant 0 : index
      %c0_9 = arith.constant 0 : index
      %8 = vector.load %arg4[%c0_8, %c0_9] : memref<32x4xf32, #tpu.memory_space<vmem>>, vector<32x4xf32>
      %cst_10 = arith.constant dense<0.000000e+00> : vector<8x4xf32>
      %9 = tpu.matmul %7, %8, %cst_10 {dimension_numbers = #tpu.dot_dimension_numbers<[1], [0], [0], [1], [0, 0, 1, 1], [], []>, precision = #tpu.contract_precision<fp32>} : vector<8x32xf32>, vector<32x4xf32>, vector<8x4xf32> -> vector<8x4xf32>
      %c0_11 = arith.constant 0 : index
      %10 = memref.load %arg2[%c0_11] : memref<1xf32, #tpu.memory_space<smem>>
      %11 = vector.broadcast %10 : f32 to vector<8x4xf32>
      %12 = arith.mulf %9, %11 : vector<8x4xf32>
      %c0_12 = arith.constant 0 : index
      %c0_13 = arith.constant 0 : index
      %13 = vector.load %arg7[%c0_12, %c0_13] : memref<8x4xf32, #tpu.memory_space<vmem>>, vector<8x4xf32>
      tpu.vector_store %arg7[%c0_12, %c0_13], %12 {strides = array<i32>} : memref<8x4xf32, #tpu.memory_space<vmem>>, vector<8x4xf32>,
    } else {
    }
    %c0 = arith.constant 0 : index
    %c0_1 = arith.constant 0 : index
    %3 = vector.load %arg7[%c0, %c0_1] : memref<8x4xf32, #tpu.memory_space<vmem>>, vector<8x4xf32>
    %c0_2 = arith.constant 0 : index
    %c0_3 = arith.constant 0 : index
    %4 = vector.load %arg5[%c0_2, %c0_3] : memref<4x64xf32, #tpu.memory_space<vmem>>, vector<4x64xf32>
    %cst = arith.constant dense<0.000000e+00> : vector<8x64xf32>
    %5 = tpu.matmul %3, %4, %cst {dimension_numbers = #tpu.dot_dimension_numbers<[1], [0], [0], [1], [0, 0, 1, 1], [], []>, precision = #tpu.contract_precision<fp32>} : vector<8x4xf32>, vector<4x64xf32>, vector<8x64xf32> -> vector<8x64xf32>
    %c0_4 = arith.constant 0 : index
    %c0_5 = arith.constant 0 : index
    %6 = vector.load %arg6[%c0_4, %c0_5] : memref<8x64xf32, #tpu.memory_space<vmem>>, vector<8x64xf32>
    tpu.vector_store %arg6[%c0_4, %c0_5], %5 {strides = array<i32>} : memref<8x64xf32, #tpu.memory_space<vmem>>, vector<8x64xf32>,
    return
  }
  func.func @transform_0(%arg0: i32, %arg1: i32) -> i32 {
    %c0_i32 = arith.constant 0 : i32
    %c0_i32_0 = arith.constant 0 : i32
    return %c0_i32 : i32
  }
  func.func @transform_1(%arg0: i32, %arg1: i32) -> (i32, i32) {
    %c0_i32 = arith.constant 0 : i32
    %c0_i32_0 = arith.constant 0 : i32
    return %arg0, %c0_i32 : i32, i32
  }
  func.func @transform_2(%arg0: i32, %arg1: i32) -> (i32, i32) {
    %c0_i32 = arith.constant 0 : i32
    %c0_i32_0 = arith.constant 0 : i32
    %c0_i32_1 = arith.constant 0 : i32
    return %c0_i32, %c0_i32_0 : i32, i32
  }
  func.func @transform_3(%arg0: i32, %arg1: i32) -> (i32, i32) {
    %c0_i32 = arith.constant 0 : i32
    %c0_i32_0 = arith.constant 0 : i32
    return %c0_i32, %arg1 : i32, i32
  }
  func.func @transform_4(%arg0: i32, %arg1: i32) -> (i32, i32) {
    %c0_i32 = arith.constant 0 : i32
    return %arg0, %arg1 : i32, i32
  }
}

</mosaic_0001>

<llo_original>
// kernel: tpu_custom_call.1
$region0: #{tpu_custom_call.1}
  #allocation0 [shape = 'u32[]', space=smem, size = 0x4, offset = 0x4, fixed_abs, tag = 'smem constant byte address 0x4 - core index']
  #allocation1 [shape = 'u32[144,128]{1,0:T(1,128)}', space=vmem, size = 0x12000, scoped, tag = 'internal scratch']
  #allocation2 [shape = 'f32[8,4]{1,0:T(8,128)}', space=vmem, size = 0x1000, scoped, tag = 'scratch operand']
  #allocation3 [shape = 'f32[1]{0:T(128)S(6)}', space=smem, size = 0x200, scoped, tag = 'scoped memory for tpu_custom_call.1']
  %s0 = inlined_call_operand.<no memory space> [shape: f32[1], index: 0, kind: input, shape index: {}]
  %s1 = inlined_call_operand.vmem [shape: f32[16,32], index: 1, kind: input, shape index: {}]
  %s2 = inlined_call_operand.vmem [shape: f32[32,4], index: 2, kind: input, shape index: {}]
  %s3 = inlined_call_operand.vmem [shape: f32[4,64], index: 3, kind: input, shape index: {}]
  %s4 = inlined_call_operand.hbm [shape: f32[16,64], index: 4, kind: output, shape index: {}]
  %s5 = sld [smem:[#allocation0]]
  $region53: #{tpu_custom_call.1} parent=0
    _
  %s7 = ssub.s32 1, %s5
  %s8 = scalar_select 0, %s7, %s5
  %9 = sst [smem:[#allocation3]] %s0
  $region1: #{tpu_custom_call.1} parent=0
    #allocation4 [shape = 'u8[8192]{0}', space=vmem, size = 0x2000, scoped, tag = 'output window, operand 0']
    #allocation5 [shape = 's32[2]{0}', space=sflag, size = 0x8, scoped, tag = 'scoped memory for tpu_custom_call.1']
    %10 = vsyncpa [#allocation5], 0
    %s11 = scalar_lea.sflag [#allocation5], 1
    %12 = vsyncpa %s11, 0
    loop: start=0, step=1, limit=4
    $region2: #{tpu_custom_call.1} parent=1 // loop_pre_header
      _
    $region3: #{tpu_custom_call.1} parent=1 // loop_header
      %s14 = sphi 0, %s18
      %p15 = scmp.ge.s32.totalorder %s14, 4
      %s21 = sphi 0, %s33
      %s22 = sphi 0, %s29
      %s23 = sphi 0, %s21
      %s24 = sphi 0, %s22
      %s25 = sphi 0, %s23
      %s26 = sphi 0, %s24
      %s34 = sphi 0, %s34
      %s36 = sphi 0, %s34
      %s37 = sphi 0, %s36
      %s51 = sphi 0, %s37
      %s57 = sphi 0, %s59
      %s60 = sphi 0, %s57
      %s61 = sphi 0, %s60
      %s77 = sphi 0, %s61
      %s81 = sphi 0, %s81
      %s83 = sphi 0, %s81
      %s84 = sphi 0, %s83
      %s98 = sphi 0, %s84
      %s104 = sphi 0, %s106
      %s107 = sphi 0, %s104
      %s108 = sphi 0, %s107
      %s124 = sphi 0, %s108
      %s132 = sphi 0, %s134
      %s135 = sphi 0, %s132
      %s136 = sphi 0, %s135
      %s152 = sphi 0, %s136
    $region4: #{tpu_custom_call.1} parent=1 // loop_header_branch
      %17 = sbr.rel (%p15) target = $region8
    $region5: #{tpu_custom_call.1} parent=1 // loop_body
      %s19 = ssub.s32 %s14, 1
      %s20 = ssub.s32 %s14, 2
      %s27 = sadd.s32 1, %s22
      %p28 = scmp.ge.s32.totalorder %s27, 1
      %s29 = scalar_select %p28, 0, %s27
      %s30 = sadd.s32 1, %s21
      %s31 = scalar_select %p28, %s30, %s21
      %p32 = scmp.ge.s32.totalorder %s31, 2
      %s33 = scalar_select %p32, 0, %s31
      %s35 = sadd.s32 %s34, 1
      %p38 = scmp.eq.s32.totalorder %s14, 1
      %p39 = scmp.ne.s32.totalorder %s34, %s36
      %p40 = scmp.eq.s32.totalorder %s14, 0
      %p41 = por %p39, %p40
      %p42 = scmp.ne.s32.totalorder %s34, %s36
      %p43 = scmp.eq.s32.totalorder %s19, 1
      %p44 = por %p42, %p43
      %p45 = scmp.ne.s32.totalorder %s36, %s37
      %p46 = scmp.eq.s32.totalorder %s19, 0
      %p47 = por %p45, %p46
      %p48 = scmp.ne.s32.totalorder %s36, %s37
      %p49 = scmp.eq.s32.totalorder %s20, 1
      %p50 = por %p48, %p49
      %p52 = scmp.ne.s32.totalorder %s37, %s51
      %p53 = scmp.eq.s32.totalorder %s20, 0
      %p54 = por %p52, %p53
      %s55 = ssub.s32 %s21, %s33
      %p56 = scmp.eq.s32.totalorder %s55, 0
      %s58 = sadd.s32 %s57, 1
      %s59 = scalar_select %p56, %s57, %s58
      %p62 = pneg %p56
      %p63 = scmp.eq.s32.totalorder %s14, 1
      %p64 = por %p62, %p63
      %p65 = scmp.ne.s32.totalorder %s57, %s60
      %p66 = scmp.eq.s32.totalorder %s14, 0
      %p67 = por %p65, %p66
      %p68 = scmp.ne.s32.totalorder %s57, %s60
      %p69 = scmp.eq.s32.totalorder %s19, 1
      %p70 = por %p68, %p69
      %p71 = scmp.ne.s32.totalorder %s60, %s61
      %p72 = scmp.eq.s32.totalorder %s19, 0
      %p73 = por %p71, %p72
      %p74 = scmp.ne.s32.totalorder %s60, %s61
      %p75 = scmp.eq.s32.totalorder %s20, 1
      %p76 = por %p74, %p75
      %p78 = scmp.ne.s32.totalorder %s61, %s77
      %p79 = scmp.eq.s32.totalorder %s20, 0
      %p80 = por %p78, %p79
      %s82 = sadd.s32 %s81, 1
      %p85 = scmp.eq.s32.totalorder %s14, 1
      %p86 = scmp.ne.s32.totalorder %s81, %s83
      %p87 = scmp.eq.s32.totalorder %s14, 0
      %p88 = por %p86, %p87
      %p89 = scmp.ne.s32.totalorder %s81, %s83
      %p90 = scmp.eq.s32.totalorder %s19, 1
      %p91 = por %p89, %p90
      %p92 = scmp.ne.s32.totalorder %s83, %s84
      %p93 = scmp.eq.s32.totalorder %s19, 0
      %p94 = por %p92, %p93
      %p95 = scmp.ne.s32.totalorder %s83, %s84
      %p96 = scmp.eq.s32.totalorder %s20, 1
      %p97 = por %p95, %p96
      %p99 = scmp.ne.s32.totalorder %s84, %s98
      %p100 = scmp.eq.s32.totalorder %s20, 0
      %p101 = por %p99, %p100
      %s102 = ssub.s32 %s22, %s29
      %p103 = scmp.eq.s32.totalorder %s102, 0
      %s105 = sadd.s32 %s104, 1
      %s106 = scalar_select %p103, %s104, %s105
      %p109 = pneg %p103
      %p110 = scmp.eq.s32.totalorder %s14, 1
      %p111 = por %p109, %p110
      %p112 = scmp.ne.s32.totalorder %s104, %s107
      %p113 = scmp.eq.s32.totalorder %s14, 0
      %p114 = por %p112, %p113
      %p115 = scmp.ne.s32.totalorder %s104, %s107
      %p116 = scmp.eq.s32.totalorder %s19, 1
      %p117 = por %p115, %p116
      %p118 = scmp.ne.s32.totalorder %s107, %s108
      %p119 = scmp.eq.s32.totalorder %s19, 0
      %p120 = por %p118, %p119
      %p121 = scmp.ne.s32.totalorder %s107, %s108
      %p122 = scmp.eq.s32.totalorder %s20, 1
      %p123 = por %p121, %p122
      %p125 = scmp.ne.s32.totalorder %s108, %s124
      %p126 = scmp.eq.s32.totalorder %s20, 0
      %p127 = por %p125, %p126
      %s128 = ssub.s32 %s21, %s33
      %s129 = ssub.s32 %s22, %s29
      %s130 = sor.u32 %s128, %s129
      %p131 = scmp.eq.s32.totalorder %s130, 0
      %s133 = sadd.s32 %s132, 1
      %s134 = scalar_select %p131, %s132, %s133
      %p137 = pneg %p131
      %p138 = scmp.eq.s32.totalorder %s14, 1
      %p139 = por %p137, %p138
      %p140 = scmp.ne.s32.totalorder %s132, %s135
      %p141 = scmp.eq.s32.totalorder %s14, 0
      %p142 = por %p140, %p141
      %p143 = scmp.ne.s32.totalorder %s132, %s135
      %p144 = scmp.eq.s32.totalorder %s19, 1
      %p145 = por %p143, %p144
      %p146 = scmp.ne.s32.totalorder %s135, %s136
      %p147 = scmp.eq.s32.totalorder %s19, 0
      %p148 = por %p146, %p147
      %p149 = scmp.ne.s32.totalorder %s135, %s136
      %p150 = scmp.eq.s32.totalorder %s20, 1
      %p151 = por %p149, %p150
      %p153 = scmp.ne.s32.totalorder %s136, %s152
      %p154 = scmp.eq.s32.totalorder %s20, 0
      %p155 = por %p153, %p154
      %p156 = scmp.le.s32.totalorder 1, %s14
      %p157 = scmp.lt.s32.totalorder %s14, 3
      %p158 = pnand %p156, %p157
      %p159 = pneg %p158
      // Predicated region
      $region9: #{tpu_custom_call.1} parent=5 // pred_check
        _
      $region10: #{tpu_custom_call.1} parent=5 // pred_check_branch
        %161 = sbr.rel (%p158) target = $region12
      $region11: #{tpu_custom_call.1} parent=5 // pred_region
        %s162 = ssub.s32 %s14, 1
        // Predicated region
        $region13: #{tpu_custom_call.1} parent=11 // pred_check
          %p163 = pneg %p47
        $region14: #{tpu_custom_call.1} parent=11 // pred_check_branch
          %165 = sbr.rel (%p163) target = $region16
        $region15: #{tpu_custom_call.1} parent=11 // pred_region
          _
        $region16: #{tpu_custom_call.1} parent=11 // pred_fallthru
          _
        // Predicated region
        $region17: #{tpu_custom_call.1} parent=11 // pred_check
          %p166 = pneg %p94
        $region18: #{tpu_custom_call.1} parent=11 // pred_check_branch
          %168 = sbr.rel (%p166) target = $region20
        $region19: #{tpu_custom_call.1} parent=11 // pred_region
          _
        $region20: #{tpu_custom_call.1} parent=11 // pred_fallthru
          _
        // Predicated region
        $region21: #{tpu_custom_call.1} parent=11 // pred_check
          %p169 = pneg %p120
        $region22: #{tpu_custom_call.1} parent=11 // pred_check_branch
          %171 = sbr.rel (%p169) target = $region24
        $region23: #{tpu_custom_call.1} parent=11 // pred_region
          %p172 = scmp.lt.s32.totalorder %s24, 0
          %s173 = scalar_select %p172, %s24, 0
          %s174 = smul.addr %s173, 4
          %s175 = scalar_lea.vmem %s3, %s174
        $region24: #{tpu_custom_call.1} parent=11 // pred_fallthru
          _
      $region12: #{tpu_custom_call.1} parent=5 // pred_fallthru
        _
      %p176 = scmp.lt.s32.totalorder %s14, 2
      // Predicated region
      $region25: #{tpu_custom_call.1} parent=5 // pred_check
        %p177 = pneg %p176
      $region26: #{tpu_custom_call.1} parent=5 // pred_check_branch
        %179 = sbr.rel (%p177) target = $region28
      $region27: #{tpu_custom_call.1} parent=5 // pred_region
        // Predicated region
        $region29: #{tpu_custom_call.1} parent=27 // pred_check
          %p180 = pneg %p67
        $region30: #{tpu_custom_call.1} parent=27 // pred_check_branch
          %182 = sbr.rel (%p180) target = $region32
        $region31: #{tpu_custom_call.1} parent=27 // pred_region
          %p183 = scmp.lt.s32.totalorder %s21, 1
          %s184 = scalar_select %p183, %s21, 1
          %s185 = smul.addr %s184, 8
          %s186 = scalar_lea.vmem %s1, %s185
        $region32: #{tpu_custom_call.1} parent=27 // pred_fallthru
          _
      $region28: #{tpu_custom_call.1} parent=5 // pred_fallthru
        _
      %p187 = scmp.le.s32.totalorder 1, %s14
      %p188 = scmp.lt.s32.totalorder %s14, 3
      %p189 = pnand %p187, %p188
      %p190 = pneg %p189
      // Predicated region
      $region33: #{tpu_custom_call.1} parent=5 // pred_check
        _
      $region34: #{tpu_custom_call.1} parent=5 // pred_check_branch
        %192 = sbr.rel (%p189) target = $region36
      $region35: #{tpu_custom_call.1} parent=5 // pred_region
        %s193 = ssub.s32 %s14, 1
        %p194 = pneg %p47
        %p195 = pneg %p44
        %p196 = scmp.lt.s32.totalorder %s23, 1
        %s197 = scalar_select %p196, %s23, 1
        %s198 = smul.addr %s197, 8
        %s199 = scalar_lea.vmem %s1, %s198
        %p200 = pneg %p73
        %p201 = pneg %p70
        %p202 = pneg %p94
        %p203 = pneg %p91
        %p204 = scmp.lt.s32.totalorder %s24, 0
        %s205 = scalar_select %p204, %s24, 0
        %s206 = smul.addr %s205, 4
        %s207 = scalar_lea.vmem %s3, %s206
        %p208 = pneg %p120
        %p209 = pneg %p117
        %p210 = pneg %p148
        %p211 = pneg %p145
        %s212 = sand.u32 %s135, 1
        %s213 = scalar_lea.sflag [#allocation5], %s212
        %s214 = sand.u32 %s135, 1
        %s215 = smul.addr %s214, 8
        %s216 = scalar_lea.vmem [#allocation4], %s215
        %p217 = scmp.lt.s32.totalorder %s23, 1
        %s218 = scalar_select %p217, %s23, 1
        %s219 = smul.addr %s218, 8
        %s220 = scalar_lea.vmem %s1, %s219
        %p221 = scmp.lt.s32.totalorder %s24, 0
        %s222 = scalar_select %p221, %s24, 0
        %s223 = smul.addr %s222, 4
        %s224 = scalar_lea.vmem %s3, %s223
        %p225 = scmp.eq.s32.totalorder %s24, 0
        // Predicated region
        $region37: #{tpu_custom_call.1} parent=35 // pred_check
          %p226 = pneg %p225
        $region38: #{tpu_custom_call.1} parent=35 // pred_check_branch
          %228 = sbr.rel (%p226) target = $region40
        $region39: #{tpu_custom_call.1} parent=35 // pred_region
          %v229 = vld [vmem:[%s220] sm:$0xff]
          %v230 = vld [vmem:[%s2] sm:$0xff]
          %v231 = vld [vmem:[%s2 + $0x8] sm:$0xff]
          %v232 = vld [vmem:[%s2 + $0x10] sm:$0xff]
          %v233 = vld [vmem:[%s2 + $0x18] sm:$0xff]
          %vm234 = vcmask 261120
          %v236 = vsel %vm234, %v229, 0
          %238 = vmatprep.subr.mxu0 0.0
          %v239 = vand.u32 %v230, 4294901760
          %240 = vmatpush1.msra.mxu0 %v239
          %241 = vmatprep.subr.mxu0 0.0
          %v242 = vand.u32 %v231, 4294901760
          %243 = vmatpush1.msra.mxu0 %v242
          %244 = vmatprep.subr.mxu0 0.0
          %v245 = vand.u32 %v232, 4294901760
          %246 = vmatpush1.msra.mxu0 %v245
          %247 = vmatprep.subr.mxu0 0.0
          %v248 = vand.u32 %v233, 4294901760
          %249 = vmatpush1.msra.mxu0 %v248
          %250 = vmatprep.subr.mxu0 0.0
          %251 = vmatpush1.msra.mxu0 0.0
          %252 = vmatprep.subr.mxu0 0.0
          %253 = vmatpush1.msra.mxu0 0.0
          %254 = vmatprep.subr.mxu0 0.0
          %255 = vmatpush1.msra.mxu0 0.0
          %256 = vmatprep.subr.mxu0 0.0
          %257 = vmatpush1.msra.mxu0 0.0
          %258 = vmatprep.subr.mxu0 0.0
          %259 = vmatpush1.msra.mxu0 0.0
          %260 = vmatprep.subr.mxu0 0.0
          %261 = vmatpush1.msra.mxu0 0.0
          %262 = vmatprep.subr.mxu0 0.0
          %263 = vmatpush1.msra.mxu0 0.0
          %264 = vmatprep.subr.mxu0 0.0
          %265 = vmatpush1.msra.mxu0 0.0
          %266 = vmatprep.subr.mxu0 0.0
          %267 = vmatpush1.msra.mxu0 0.0
          %268 = vmatprep.subr.mxu0 0.0
          %269 = vmatpush1.msra.mxu0 0.0
          %270 = vmatprep.subr.mxu0 0.0
          %271 = vmatpush1.msra.mxu0 0.0
          %272 = vmatprep.subr.mxu0 0.0
          %273 = vmatpush1.msra.mxu0 0.0
          %274 = vmatprep.subr.mxu0 0.0
          %275 = vmatpush1.msra.mxu0 0.0
          %276 = vmatprep.subr.mxu0 0.0
          %277 = vmatpush1.msra.mxu0 0.0
          %278 = vmatprep.subr.mxu0 0.0
          %279 = vmatpush1.msra.mxu0 0.0
          %280 = vmatprep.subr.mxu0 0.0
          %281 = vmatpush1.msra.mxu0 0.0
          %282 = vmatprep.subr.mxu0 0.0
          %283 = vmatpush1.msra.mxu0 0.0
          %284 = vmatprep.subr.mxu0 0.0
          %285 = vmatpush1.msra.mxu0 0.0
          %286 = vmatprep.subr.mxu0 0.0
          %287 = vmatpush1.msra.mxu0 0.0
          %288 = vmatprep.subr.mxu0 0.0
          %289 = vmatpush1.msra.mxu0 0.0
          %290 = vmatprep.subr.mxu0 0.0
          %291 = vmatpush1.msra.mxu0 0.0
          %292 = vmatprep.subr.mxu0 0.0
          %293 = vmatpush1.msra.mxu0 0.0
          %294 = vmatprep.subr.mxu0 0.0
          %295 = vmatpush1.msra.mxu0 0.0
          %296 = vmatprep.subr.mxu0 0.0
          %297 = vmatpush1.msra.mxu0 0.0
          %298 = vmatprep.subr.mxu0 0.0
          %299 = vmatpush1.msra.mxu0 0.0
          %300 = vmatprep.subr.mxu0 0.0
          %301 = vmatpush1.msra.mxu0 0.0
          %302 = vmatprep.subr.mxu0 0.0
          %303 = vmatpush1.msra.mxu0 0.0
          %304 = vmatprep.subr.mxu0 0.0
          %305 = vmatpush1.msra.mxu0 0.0
          %306 = vmatprep.mubr.f32.mxu0 0.0
          %v307 = vand.u32 %v236, 4294901760
          %v308 = vsub.f32 %v236, %v307
          %v309 = vand.u32 %v308, 4294901760
          %v310 = vsub.f32 %v308, %v309
          %v311 = vand.u32 %v310, 4294901760
          %312 = vmatmul.mubr.f32.gmra.mrb[0].mxu0 %v311
          %v313 = vpop.f32.mrb[0].mxu0
          %v314 = vadd.f32 0.0, %v313
          %v315 = vpop.f32.mrb[0].mxu0
          %316 = vdwg.mxu0
          %317 = vmatprep.subr.mxu0 0.0
          %v318 = vand.u32 %v230, 4294901760
          %v319 = vsub.f32 %v230, %v318
          %v320 = vand.u32 %v319, 4294901760
          %v321 = vsub.f32 %v319, %v320
          %v322 = vand.u32 %v321, 4294901760
          %323 = vmatpush1.msra.mxu0 %v322
          %324 = vmatprep.subr.mxu0 0.0
          %v325 = vand.u32 %v231, 4294901760
          %v326 = vsub.f32 %v231, %v325
          %v327 = vand.u32 %v326, 4294901760
          %v328 = vsub.f32 %v326, %v327
          %v329 = vand.u32 %v328, 4294901760
          %330 = vmatpush1.msra.mxu0 %v329
          %331 = vmatprep.subr.mxu0 0.0
          %v332 = vand.u32 %v232, 4294901760
          %v333 = vsub.f32 %v232, %v332
          %v334 = vand.u32 %v333, 4294901760
          %v335 = vsub.f32 %v333, %v334
          %v336 = vand.u32 %v335, 4294901760
          %337 = vmatpush1.msra.mxu0 %v336
          %338 = vmatprep.subr.mxu0 0.0
          %v339 = vand.u32 %v233, 4294901760
          %v340 = vsub.f32 %v233, %v339
          %v341 = vand.u32 %v340, 4294901760
          %v342 = vsub.f32 %v340, %v341
          %v343 = vand.u32 %v342, 4294901760
          %344 = vmatpush1.msra.mxu0 %v343
          %345 = vmatprep.subr.mxu0 0.0
          %346 = vmatpush1.msra.mxu0 0.0
          %347 = vmatprep.subr.mxu0 0.0
          %348 = vmatpush1.msra.mxu0 0.0
          %349 = vmatprep.subr.mxu0 0.0
          %350 = vmatpush1.msra.mxu0 0.0
          %351 = vmatprep.subr.mxu0 0.0
          %352 = vmatpush1.msra.mxu0 0.0
          %353 = vmatprep.subr.mxu0 0.0
          %354 = vmatpush1.msra.mxu0 0.0
          %355 = vmatprep.subr.mxu0 0.0
          %356 = vmatpush1.msra.mxu0 0.0
          %357 = vmatprep.subr.mxu0 0.0
          %358 = vmatpush1.msra.mxu0 0.0
          %359 = vmatprep.subr.mxu0 0.0
          %360 = vmatpush1.msra.mxu0 0.0
          %361 = vmatprep.subr.mxu0 0.0
          %362 = vmatpush1.msra.mxu0 0.0
          %363 = vmatprep.subr.mxu0 0.0
          %364 = vmatpush1.msra.mxu0 0.0
          %365 = vmatprep.subr.mxu0 0.0
          %366 = vmatpush1.msra.mxu0 0.0
          %367 = vmatprep.subr.mxu0 0.0
          %368 = vmatpush1.msra.mxu0 0.0
          %369 = vmatprep.subr.mxu0 0.0
          %370 = vmatpush1.msra.mxu0 0.0
          %371 = vmatprep.subr.mxu0 0.0
          %372 = vmatpush1.msra.mxu0 0.0
          %373 = vmatprep.subr.mxu0 0.0
          %374 = vmatpush1.msra.mxu0 0.0
          %375 = vmatprep.subr.mxu0 0.0
          %376 = vmatpush1.msra.mxu0 0.0
          %377 = vmatprep.subr.mxu0 0.0
          %378 = vmatpush1.msra.mxu0 0.0
          %379 = vmatprep.subr.mxu0 0.0
          %380 = vmatpush1.msra.mxu0 0.0
          %381 = vmatprep.subr.mxu0 0.0
          %382 = vmatpush1.msra.mxu0 0.0
          %383 = vmatprep.subr.mxu0 0.0
          %384 = vmatpush1.msra.mxu0 0.0
          %385 = vmatprep.subr.mxu0 0.0
          %386 = vmatpush1.msra.mxu0 0.0
          %387 = vmatprep.subr.mxu0 0.0
          %388 = vmatpush1.msra.mxu0 0.0
          %389 = vmatprep.subr.mxu0 0.0
          %390 = vmatpush1.msra.mxu0 0.0
          %391 = vmatprep.subr.mxu0 0.0
          %392 = vmatpush1.msra.mxu0 0.0
          %393 = vmatprep.subr.mxu0 0.0
          %394 = vmatpush1.msra.mxu0 0.0
          %395 = vmatprep.subr.mxu0 0.0
          %396 = vmatpush1.msra.mxu0 0.0
          %397 = vmatprep.subr.mxu0 0.0
          %398 = vmatpush1.msra.mxu0 0.0
          %399 = vmatprep.subr.mxu0 0.0
          %400 = vmatpush1.msra.mxu0 0.0
          %401 = vmatprep.mubr.f32.mxu0 0.0
          %v402 = vand.u32 %v236, 4294901760
          %403 = vmatmul.mubr.f32.gmra.mrb[0].mxu0 %v402
          %v404 = vpop.f32.mrb[0].mxu0
          %v405 = vadd.f32 %v314, %v404
          %v406 = vpop.f32.mrb[0].mxu0
          %407 = vdwg.mxu0
          %408 = vmatprep.subr.mxu0 0.0
          %v409 = vand.u32 %v230, 4294901760
          %v410 = vsub.f32 %v230, %v409
          %411 = vmatpush1.msra.mxu0 %v410
          %412 = vmatprep.subr.mxu0 0.0
          %v413 = vand.u32 %v231, 4294901760
          %v414 = vsub.f32 %v231, %v413
          %415 = vmatpush1.msra.mxu0 %v414
          %416 = vmatprep.subr.mxu0 0.0
          %v417 = vand.u32 %v232, 4294901760
          %v418 = vsub.f32 %v232, %v417
          %419 = vmatpush1.msra.mxu0 %v418
          %420 = vmatprep.subr.mxu0 0.0
          %v421 = vand.u32 %v233, 4294901760
          %v422 = vsub.f32 %v233, %v421
          %423 = vmatpush1.msra.mxu0 %v422
          %424 = vmatprep.subr.mxu0 0.0
          %425 = vmatpush1.msra.mxu0 0.0
          %426 = vmatprep.subr.mxu0 0.0
          %427 = vmatpush1.msra.mxu0 0.0
          %428 = vmatprep.subr.mxu0 0.0
          %429 = vmatpush1.msra.mxu0 0.0
          %430 = vmatprep.subr.mxu0 0.0
          %431 = vmatpush1.msra.mxu0 0.0
          %432 = vmatprep.subr.mxu0 0.0
          %433 = vmatpush1.msra.mxu0 0.0
          %434 = vmatprep.subr.mxu0 0.0
          %435 = vmatpush1.msra.mxu0 0.0
          %436 = vmatprep.subr.mxu0 0.0
          %437 = vmatpush1.msra.mxu0 0.0
          %438 = vmatprep.subr.mxu0 0.0
          %439 = vmatpush1.msra.mxu0 0.0
          %440 = vmatprep.subr.mxu0 0.0
          %441 = vmatpush1.msra.mxu0 0.0
          %442 = vmatprep.subr.mxu0 0.0
          %443 = vmatpush1.msra.mxu0 0.0
          %444 = vmatprep.subr.mxu0 0.0
          %445 = vmatpush1.msra.mxu0 0.0
          %446 = vmatprep.subr.mxu0 0.0
          %447 = vmatpush1.msra.mxu0 0.0
          %448 = vmatprep.subr.mxu0 0.0
          %449 = vmatpush1.msra.mxu0 0.0
          %450 = vmatprep.subr.mxu0 0.0
          %451 = vmatpush1.msra.mxu0 0.0
          %452 = vmatprep.subr.mxu0 0.0
          %453 = vmatpush1.msra.mxu0 0.0
          %454 = vmatprep.subr.mxu0 0.0
          %455 = vmatpush1.msra.mxu0 0.0
          %456 = vmatprep.subr.mxu0 0.0
          %457 = vmatpush1.msra.mxu0 0.0
          %458 = vmatprep.subr.mxu0 0.0
          %459 = vmatpush1.msra.mxu0 0.0
          %460 = vmatprep.subr.mxu0 0.0
          %461 = vmatpush1.msra.mxu0 0.0
          %462 = vmatprep.subr.mxu0 0.0
          %463 = vmatpush1.msra.mxu0 0.0
          %464 = vmatprep.subr.mxu0 0.0
          %465 = vmatpush1.msra.mxu0 0.0
          %466 = vmatprep.subr.mxu0 0.0
          %467 = vmatpush1.msra.mxu0 0.0
          %468 = vmatprep.subr.mxu0 0.0
          %469 = vmatpush1.msra.mxu0 0.0
          %470 = vmatprep.subr.mxu0 0.0
          %471 = vmatpush1.msra.mxu0 0.0
          %472 = vmatprep.subr.mxu0 0.0
          %473 = vmatpush1.msra.mxu0 0.0
          %474 = vmatprep.subr.mxu0 0.0
          %475 = vmatpush1.msra.mxu0 0.0
          %476 = vmatprep.subr.mxu0 0.0
          %477 = vmatpush1.msra.mxu0 0.0
          %478 = vmatprep.subr.mxu0 0.0
          %479 = vmatpush1.msra.mxu0 0.0
          %480 = vmatprep.mubr.f32.mxu0 0.0
          %v481 = vand.u32 %v236, 4294901760
          %v482 = vsub.f32 %v236, %v481
          %483 = vmatmul.mubr.f32.gmra.mrb[0].mxu0 %v482
          %v484 = vpop.f32.mrb[0].mxu0
          %v485 = vadd.f32 %v405, %v484
          %v486 = vpop.f32.mrb[0].mxu0
          %487 = vdwg.mxu0
          %488 = vmatprep.subr.mxu0 0.0
          %v489 = vand.u32 %v230, 4294901760
          %490 = vmatpush1.msra.mxu0 %v489
          %491 = vmatprep.subr.mxu0 0.0
          %v492 = vand.u32 %v231, 4294901760
          %493 = vmatpush1.msra.mxu0 %v492
          %494 = vmatprep.subr.mxu0 0.0
          %v495 = vand.u32 %v232, 4294901760
          %496 = vmatpush1.msra.mxu0 %v495
          %497 = vmatprep.subr.mxu0 0.0
          %v498 = vand.u32 %v233, 4294901760
          %499 = vmatpush1.msra.mxu0 %v498
          %500 = vmatprep.subr.mxu0 0.0
          %501 = vmatpush1.msra.mxu0 0.0
          %502 = vmatprep.subr.mxu0 0.0
          %503 = vmatpush1.msra.mxu0 0.0
          %504 = vmatprep.subr.mxu0 0.0
          %505 = vmatpush1.msra.mxu0 0.0
          %506 = vmatprep.subr.mxu0 0.0
          %507 = vmatpush1.msra.mxu0 0.0
          %508 = vmatprep.subr.mxu0 0.0
          %509 = vmatpush1.msra.mxu0 0.0
          %510 = vmatprep.subr.mxu0 0.0
          %511 = vmatpush1.msra.mxu0 0.0
          %512 = vmatprep.subr.mxu0 0.0
          %513 = vmatpush1.msra.mxu0 0.0
          %514 = vmatprep.subr.mxu0 0.0
          %515 = vmatpush1.msra.mxu0 0.0
          %516 = vmatprep.subr.mxu0 0.0
          %517 = vmatpush1.msra.mxu0 0.0
          %518 = vmatprep.subr.mxu0 0.0
          %519 = vmatpush1.msra.mxu0 0.0
          %520 = vmatprep.subr.mxu0 0.0
          %521 = vmatpush1.msra.mxu0 0.0
          %522 = vmatprep.subr.mxu0 0.0
          %523 = vmatpush1.msra.mxu0 0.0
          %524 = vmatprep.subr.mxu0 0.0
          %525 = vmatpush1.msra.mxu0 0.0
          %526 = vmatprep.subr.mxu0 0.0
          %527 = vmatpush1.msra.mxu0 0.0
          %528 = vmatprep.subr.mxu0 0.0
          %529 = vmatpush1.msra.mxu0 0.0
          %530 = vmatprep.subr.mxu0 0.0
          %531 = vmatpush1.msra.mxu0 0.0
          %532 = vmatprep.subr.mxu0 0.0
          %533 = vmatpush1.msra.mxu0 0.0
          %534 = vmatprep.subr.mxu0 0.0
          %535 = vmatpush1.msra.mxu0 0.0
          %536 = vmatprep.subr.mxu0 0.0
          %537 = vmatpush1.msra.mxu0 0.0
          %538 = vmatprep.subr.mxu0 0.0
          %539 = vmatpush1.msra.mxu0 0.0
          %540 = vmatprep.subr.mxu0 0.0
          %541 = vmatpush1.msra.mxu0 0.0
          %542 = vmatprep.subr.mxu0 0.0
          %543 = vmatpush1.msra.mxu0 0.0
          %544 = vmatprep.subr.mxu0 0.0
          %545 = vmatpush1.msra.mxu0 0.0
          %546 = vmatprep.subr.mxu0 0.0
          %547 = vmatpush1.msra.mxu0 0.0
          %548 = vmatprep.subr.mxu0 0.0
          %549 = vmatpush1.msra.mxu0 0.0
          %550 = vmatprep.subr.mxu0 0.0
          %551 = vmatpush1.msra.mxu0 0.0
          %552 = vmatprep.subr.mxu0 0.0
          %553 = vmatpush1.msra.mxu0 0.0
          %554 = vmatprep.subr.mxu0 0.0
          %555 = vmatpush1.msra.mxu0 0.0
          %556 = vmatprep.mubr.f32.mxu0 0.0
          %v557 = vand.u32 %v236, 4294901760
          %v558 = vsub.f32 %v236, %v557
          %v559 = vand.u32 %v558, 4294901760
          %560 = vmatmul.mubr.f32.gmra.mrb[0].mxu0 %v559
          %v561 = vpop.f32.mrb[0].mxu0
          %v562 = vadd.f32 %v485, %v561
          %v563 = vpop.f32.mrb[0].mxu0
          %564 = vdwg.mxu0
          %565 = vmatprep.subr.mxu0 0.0
          %v566 = vand.u32 %v230, 4294901760
          %v567 = vsub.f32 %v230, %v566
          %v568 = vand.u32 %v567, 4294901760
          %569 = vmatpush1.msra.mxu0 %v568
          %570 = vmatprep.subr.mxu0 0.0
          %v571 = vand.u32 %v231, 4294901760
          %v572 = vsub.f32 %v231, %v571
          %v573 = vand.u32 %v572, 4294901760
          %574 = vmatpush1.msra.mxu0 %v573
          %575 = vmatprep.subr.mxu0 0.0
          %v576 = vand.u32 %v232, 4294901760
          %v577 = vsub.f32 %v232, %v576
          %v578 = vand.u32 %v577, 4294901760
          %579 = vmatpush1.msra.mxu0 %v578
          %580 = vmatprep.subr.mxu0 0.0
          %v581 = vand.u32 %v233, 4294901760
          %v582 = vsub.f32 %v233, %v581
          %v583 = vand.u32 %v582, 4294901760
          %584 = vmatpush1.msra.mxu0 %v583
          %585 = vmatprep.subr.mxu0 0.0
          %586 = vmatpush1.msra.mxu0 0.0
          %587 = vmatprep.subr.mxu0 0.0
          %588 = vmatpush1.msra.mxu0 0.0
          %589 = vmatprep.subr.mxu0 0.0
          %590 = vmatpush1.msra.mxu0 0.0
          %591 = vmatprep.subr.mxu0 0.0
          %592 = vmatpush1.msra.mxu0 0.0
          %593 = vmatprep.subr.mxu0 0.0
          %594 = vmatpush1.msra.mxu0 0.0
          %595 = vmatprep.subr.mxu0 0.0
          %596 = vmatpush1.msra.mxu0 0.0
          %597 = vmatprep.subr.mxu0 0.0
          %598 = vmatpush1.msra.mxu0 0.0
          %599 = vmatprep.subr.mxu0 0.0
          %600 = vmatpush1.msra.mxu0 0.0
          %601 = vmatprep.subr.mxu0 0.0
          %602 = vmatpush1.msra.mxu0 0.0
          %603 = vmatprep.subr.mxu0 0.0
          %604 = vmatpush1.msra.mxu0 0.0
          %605 = vmatprep.subr.mxu0 0.0
          %606 = vmatpush1.msra.mxu0 0.0
          %607 = vmatprep.subr.mxu0 0.0
          %608 = vmatpush1.msra.mxu0 0.0
          %609 = vmatprep.subr.mxu0 0.0
          %610 = vmatpush1.msra.mxu0 0.0
          %611 = vmatprep.subr.mxu0 0.0
          %612 = vmatpush1.msra.mxu0 0.0
          %613 = vmatprep.subr.mxu0 0.0
          %614 = vmatpush1.msra.mxu0 0.0
          %615 = vmatprep.subr.mxu0 0.0
          %616 = vmatpush1.msra.mxu0 0.0
          %617 = vmatprep.subr.mxu0 0.0
          %618 = vmatpush1.msra.mxu0 0.0
          %619 = vmatprep.subr.mxu0 0.0
          %620 = vmatpush1.msra.mxu0 0.0
          %621 = vmatprep.subr.mxu0 0.0
          %622 = vmatpush1.msra.mxu0 0.0
          %623 = vmatprep.subr.mxu0 0.0
          %624 = vmatpush1.msra.mxu0 0.0
          %625 = vmatprep.subr.mxu0 0.0
          %626 = vmatpush1.msra.mxu0 0.0
          %627 = vmatprep.subr.mxu0 0.0
          %628 = vmatpush1.msra.mxu0 0.0
          %629 = vmatprep.subr.mxu0 0.0
          %630 = vmatpush1.msra.mxu0 0.0
          %631 = vmatprep.subr.mxu0 0.0
          %632 = vmatpush1.msra.mxu0 0.0
          %633 = vmatprep.subr.mxu0 0.0
          %634 = vmatpush1.msra.mxu0 0.0
          %635 = vmatprep.subr.mxu0 0.0
          %636 = vmatpush1.msra.mxu0 0.0
          %637 = vmatprep.subr.mxu0 0.0
          %638 = vmatpush1.msra.mxu0 0.0
          %639 = vmatprep.subr.mxu0 0.0
          %640 = vmatpush1.msra.mxu0 0.0
          %641 = vmatprep.mubr.f32.mxu0 0.0
          %v642 = vand.u32 %v236, 4294901760
          %643 = vmatmul.mubr.f32.gmra.mrb[0].mxu0 %v642
          %v644 = vpop.f32.mrb[0].mxu0
          %v645 = vadd.f32 %v562, %v644
          %v646 = vpop.f32.mrb[0].mxu0
          %647 = vdwg.mxu0
          %648 = vmatprep.subr.mxu0 0.0
          %v649 = vand.u32 %v230, 4294901760
          %650 = vmatpush1.msra.mxu0 %v649
          %651 = vmatprep.subr.mxu0 0.0
          %v652 = vand.u32 %v231, 4294901760
          %653 = vmatpush1.msra.mxu0 %v652
          %654 = vmatprep.subr.mxu0 0.0
          %v655 = vand.u32 %v232, 4294901760
          %656 = vmatpush1.msra.mxu0 %v655
          %657 = vmatprep.subr.mxu0 0.0
          %v658 = vand.u32 %v233, 4294901760
          %659 = vmatpush1.msra.mxu0 %v658
          %660 = vmatprep.subr.mxu0 0.0
          %661 = vmatpush1.msra.mxu0 0.0
          %662 = vmatprep.subr.mxu0 0.0
          %663 = vmatpush1.msra.mxu0 0.0
          %664 = vmatprep.subr.mxu0 0.0
          %665 = vmatpush1.msra.mxu0 0.0
          %666 = vmatprep.subr.mxu0 0.0
          %667 = vmatpush1.msra.mxu0 0.0
          %668 = vmatprep.subr.mxu0 0.0
          %669 = vmatpush1.msra.mxu0 0.0
          %670 = vmatprep.subr.mxu0 0.0
          %671 = vmatpush1.msra.mxu0 0.0
          %672 = vmatprep.subr.mxu0 0.0
          %673 = vmatpush1.msra.mxu0 0.0
          %674 = vmatprep.subr.mxu0 0.0
          %675 = vmatpush1.msra.mxu0 0.0
          %676 = vmatprep.subr.mxu0 0.0
          %677 = vmatpush1.msra.mxu0 0.0
          %678 = vmatprep.subr.mxu0 0.0
          %679 = vmatpush1.msra.mxu0 0.0
          %680 = vmatprep.subr.mxu0 0.0
          %681 = vmatpush1.msra.mxu0 0.0
          %682 = vmatprep.subr.mxu0 0.0
          %683 = vmatpush1.msra.mxu0 0.0
          %684 = vmatprep.subr.mxu0 0.0
          %685 = vmatpush1.msra.mxu0 0.0
          %686 = vmatprep.subr.mxu0 0.0
          %687 = vmatpush1.msra.mxu0 0.0
          %688 = vmatprep.subr.mxu0 0.0
          %689 = vmatpush1.msra.mxu0 0.0
          %690 = vmatprep.subr.mxu0 0.0
          %691 = vmatpush1.msra.mxu0 0.0
          %692 = vmatprep.subr.mxu0 0.0
          %693 = vmatpush1.msra.mxu0 0.0
          %694 = vmatprep.subr.mxu0 0.0
          %695 = vmatpush1.msra.mxu0 0.0
          %696 = vmatprep.subr.mxu0 0.0
          %697 = vmatpush1.msra.mxu0 0.0
          %698 = vmatprep.subr.mxu0 0.0
          %699 = vmatpush1.msra.mxu0 0.0
          %700 = vmatprep.subr.mxu0 0.0
          %701 = vmatpush1.msra.mxu0 0.0
          %702 = vmatprep.subr.mxu0 0.0
          %703 = vmatpush1.msra.mxu0 0.0
          %704 = vmatprep.subr.mxu0 0.0
          %705 = vmatpush1.msra.mxu0 0.0
          %706 = vmatprep.subr.mxu0 0.0
          %707 = vmatpush1.msra.mxu0 0.0
          %708 = vmatprep.subr.mxu0 0.0
          %709 = vmatpush1.msra.mxu0 0.0
          %710 = vmatprep.subr.mxu0 0.0
          %711 = vmatpush1.msra.mxu0 0.0
          %712 = vmatprep.subr.mxu0 0.0
          %713 = vmatpush1.msra.mxu0 0.0
          %714 = vmatprep.subr.mxu0 0.0
          %715 = vmatpush1.msra.mxu0 0.0
          %716 = vmatprep.mubr.f32.mxu0 0.0
          %v717 = vand.u32 %v236, 4294901760
          %718 = vmatmul.mubr.f32.gmra.mrb[0].mxu0 %v717
          %v719 = vpop.f32.mrb[0].mxu0
          %v720 = vadd.f32 %v645, %v719
          %v721 = vpop.f32.mrb[0].mxu0
          %722 = vdwg.mxu0
          %s723 = sld [smem:[#allocation3]]
          %v724 = vstv %s723
          %v725 = vmul.f32 %v720, %v724
          %vm726 = vcmask 31744
          %727 = vst.msk [vmem:[#allocation2] sm:$0xff] %vm726, %v725
        $region40: #{tpu_custom_call.1} parent=35 // pred_fallthru
          _
        %v728 = vld [vmem:[#allocation2] sm:$0xff]
        %v729 = vld [vmem:[%s224] sm:$0xf]
        %vm730 = vcmask 31744
        %v732 = vsel %vm730, %v728, 0
        %vm734 = vcmask 1043456
        %v736 = vsel %vm734, %v729, 0
        %738 = vmatprep.subr.mxu0 0.0
        %v739 = vand.u32 %v736, 4294901760
        %740 = vmatpush1.msra.mxu0 %v739
        %741 = vmatprep.subr.mxu0 0.0
        %742 = vmatpush1.msra.mxu0 0.0
        %743 = vmatprep.subr.mxu0 0.0
        %744 = vmatpush1.msra.mxu0 0.0
        %745 = vmatprep.subr.mxu0 0.0
        %746 = vmatpush1.msra.mxu0 0.0
        %747 = vmatprep.subr.mxu0 0.0
        %748 = vmatpush1.msra.mxu0 0.0
        %749 = vmatprep.subr.mxu0 0.0
        %750 = vmatpush1.msra.mxu0 0.0
        %751 = vmatprep.subr.mxu0 0.0
        %752 = vmatpush1.msra.mxu0 0.0
        %753 = vmatprep.subr.mxu0 0.0
        %754 = vmatpush1.msra.mxu0 0.0
        %755 = vmatprep.subr.mxu0 0.0
        %756 = vmatpush1.msra.mxu0 0.0
        %757 = vmatprep.subr.mxu0 0.0
        %758 = vmatpush1.msra.mxu0 0.0
        %759 = vmatprep.subr.mxu0 0.0
        %760 = vmatpush1.msra.mxu0 0.0
        %761 = vmatprep.subr.mxu0 0.0
        %762 = vmatpush1.msra.mxu0 0.0
        %763 = vmatprep.subr.mxu0 0.0
        %764 = vmatpush1.msra.mxu0 0.0
        %765 = vmatprep.subr.mxu0 0.0
        %766 = vmatpush1.msra.mxu0 0.0
        %767 = vmatprep.subr.mxu0 0.0
        %768 = vmatpush1.msra.mxu0 0.0
        %769 = vmatprep.subr.mxu0 0.0
        %770 = vmatpush1.msra.mxu0 0.0
        %771 = vmatprep.subr.mxu0 0.0
        %772 = vmatpush1.msra.mxu0 0.0
        %773 = vmatprep.subr.mxu0 0.0
        %774 = vmatpush1.msra.mxu0 0.0
        %775 = vmatprep.subr.mxu0 0.0
        %776 = vmatpush1.msra.mxu0 0.0
        %777 = vmatprep.subr.mxu0 0.0
        %778 = vmatpush1.msra.mxu0 0.0
        %779 = vmatprep.subr.mxu0 0.0
        %780 = vmatpush1.msra.mxu0 0.0
        %781 = vmatprep.subr.mxu0 0.0
        %782 = vmatpush1.msra.mxu0 0.0
        %783 = vmatprep.subr.mxu0 0.0
        %784 = vmatpush1.msra.mxu0 0.0
        %785 = vmatprep.subr.mxu0 0.0
        %786 = vmatpush1.msra.mxu0 0.0
        %787 = vmatprep.subr.mxu0 0.0
        %788 = vmatpush1.msra.mxu0 0.0
        %789 = vmatprep.subr.mxu0 0.0
        %790 = vmatpush1.msra.mxu0 0.0
        %791 = vmatprep.subr.mxu0 0.0
        %792 = vmatpush1.msra.mxu0 0.0
        %793 = vmatprep.subr.mxu0 0.0
        %794 = vmatpush1.msra.mxu0 0.0
        %795 = vmatprep.subr.mxu0 0.0
        %796 = vmatpush1.msra.mxu0 0.0
        %797 = vmatprep.subr.mxu0 0.0
        %798 = vmatpush1.msra.mxu0 0.0
        %799 = vmatprep.subr.mxu0 0.0
        %800 = vmatpush1.msra.mxu0 0.0
        %801 = vmatprep.subr.mxu0 0.0
        %802 = vmatpush1.msra.mxu0 0.0
        %803 = vmatprep.mubr.f32.mxu0 0.0
        %v804 = vand.u32 %v732, 4294901760
        %v805 = vsub.f32 %v732, %v804
        %v806 = vand.u32 %v805, 4294901760
        %v807 = vsub.f32 %v805, %v806
        %v808 = vand.u32 %v807, 4294901760
        %809 = vmatmul.mubr.f32.gmra.mrb[0].mxu0 %v808
        %v810 = vpop.f32.mrb[0].mxu0
        %v811 = vadd.f32 0.0, %v810
        %v812 = vpop.f32.mrb[0].mxu0
        %813 = vdwg.mxu0
        %814 = vmatprep.subr.mxu0 0.0
        %v815 = vand.u32 %v736, 4294901760
        %v816 = vsub.f32 %v736, %v815
        %v817 = vand.u32 %v816, 4294901760
        %v818 = vsub.f32 %v816, %v817
        %v819 = vand.u32 %v818, 4294901760
        %820 = vmatpush1.msra.mxu0 %v819
        %821 = vmatprep.subr.mxu0 0.0
        %822 = vmatpush1.msra.mxu0 0.0
        %823 = vmatprep.subr.mxu0 0.0
        %824 = vmatpush1.msra.mxu0 0.0
        %825 = vmatprep.subr.mxu0 0.0
        %826 = vmatpush1.msra.mxu0 0.0
        %827 = vmatprep.subr.mxu0 0.0
        %828 = vmatpush1.msra.mxu0 0.0
        %829 = vmatprep.subr.mxu0 0.0
        %830 = vmatpush1.msra.mxu0 0.0
        %831 = vmatprep.subr.mxu0 0.0
        %832 = vmatpush1.msra.mxu0 0.0
        %833 = vmatprep.subr.mxu0 0.0
        %834 = vmatpush1.msra.mxu0 0.0
        %835 = vmatprep.subr.mxu0 0.0
        %836 = vmatpush1.msra.mxu0 0.0
        %837 = vmatprep.subr.mxu0 0.0
        %838 = vmatpush1.msra.mxu0 0.0
        %839 = vmatprep.subr.mxu0 0.0
        %840 = vmatpush1.msra.mxu0 0.0
        %841 = vmatprep.subr.mxu0 0.0
        %842 = vmatpush1.msra.mxu0 0.0
        %843 = vmatprep.subr.mxu0 0.0
        %844 = vmatpush1.msra.mxu0 0.0
        %845 = vmatprep.subr.mxu0 0.0
        %846 = vmatpush1.msra.mxu0 0.0
        %847 = vmatprep.subr.mxu0 0.0
        %848 = vmatpush1.msra.mxu0 0.0
        %849 = vmatprep.subr.mxu0 0.0
        %850 = vmatpush1.msra.mxu0 0.0
        %851 = vmatprep.subr.mxu0 0.0
        %852 = vmatpush1.msra.mxu0 0.0
        %853 = vmatprep.subr.mxu0 0.0
        %854 = vmatpush1.msra.mxu0 0.0
        %855 = vmatprep.subr.mxu0 0.0
        %856 = vmatpush1.msra.mxu0 0.0
        %857 = vmatprep.subr.mxu0 0.0
        %858 = vmatpush1.msra.mxu0 0.0
        %859 = vmatprep.subr.mxu0 0.0
        %860 = vmatpush1.msra.mxu0 0.0
        %861 = vmatprep.subr.mxu0 0.0
        %862 = vmatpush1.msra.mxu0 0.0
        %863 = vmatprep.subr.mxu0 0.0
        %864 = vmatpush1.msra.mxu0 0.0
        %865 = vmatprep.subr.mxu0 0.0
        %866 = vmatpush1.msra.mxu0 0.0
        %867 = vmatprep.subr.mxu0 0.0
        %868 = vmatpush1.msra.mxu0 0.0
        %869 = vmatprep.subr.mxu0 0.0
        %870 = vmatpush1.msra.mxu0 0.0
        %871 = vmatprep.subr.mxu0 0.0
        %872 = vmatpush1.msra.mxu0 0.0
        %873 = vmatprep.subr.mxu0 0.0
        %874 = vmatpush1.msra.mxu0 0.0
        %875 = vmatprep.subr.mxu0 0.0
        %876 = vmatpush1.msra.mxu0 0.0
        %877 = vmatprep.subr.mxu0 0.0
        %878 = vmatpush1.msra.mxu0 0.0
        %879 = vmatprep.subr.mxu0 0.0
        %880 = vmatpush1.msra.mxu0 0.0
        %881 = vmatprep.subr.mxu0 0.0
        %882 = vmatpush1.msra.mxu0 0.0
        %883 = vmatprep.mubr.f32.mxu0 0.0
        %v884 = vand.u32 %v732, 4294901760
        %885 = vmatmul.mubr.f32.gmra.mrb[0].mxu0 %v884
        %v886 = vpop.f32.mrb[0].mxu0
        %v887 = vadd.f32 %v811, %v886
        %v888 = vpop.f32.mrb[0].mxu0
        %889 = vdwg.mxu0
        %890 = vmatprep.subr.mxu0 0.0
        %v891 = vand.u32 %v736, 4294901760
        %v892 = vsub.f32 %v736, %v891
        %893 = vmatpush1.msra.mxu0 %v892
        %894 = vmatprep.subr.mxu0 0.0
        %895 = vmatpush1.msra.mxu0 0.0
        %896 = vmatprep.subr.mxu0 0.0
        %897 = vmatpush1.msra.mxu0 0.0
        %898 = vmatprep.subr.mxu0 0.0
        %899 = vmatpush1.msra.mxu0 0.0
        %900 = vmatprep.subr.mxu0 0.0
        %901 = vmatpush1.msra.mxu0 0.0
        %902 = vmatprep.subr.mxu0 0.0
        %903 = vmatpush1.msra.mxu0 0.0
        %904 = vmatprep.subr.mxu0 0.0
        %905 = vmatpush1.msra.mxu0 0.0
        %906 = vmatprep.subr.mxu0 0.0
        %907 = vmatpush1.msra.mxu0 0.0
        %908 = vmatprep.subr.mxu0 0.0
        %909 = vmatpush1.msra.mxu0 0.0
        %910 = vmatprep.subr.mxu0 0.0
        %911 = vmatpush1.msra.mxu0 0.0
        %912 = vmatprep.subr.mxu0 0.0
        %913 = vmatpush1.msra.mxu0 0.0
        %914 = vmatprep.subr.mxu0 0.0
        %915 = vmatpush1.msra.mxu0 0.0
        %916 = vmatprep.subr.mxu0 0.0
        %917 = vmatpush1.msra.mxu0 0.0
        %918 = vmatprep.subr.mxu0 0.0
        %919 = vmatpush1.msra.mxu0 0.0
        %920 = vmatprep.subr.mxu0 0.0
        %921 = vmatpush1.msra.mxu0 0.0
        %922 = vmatprep.subr.mxu0 0.0
        %923 = vmatpush1.msra.mxu0 0.0
        %924 = vmatprep.subr.mxu0 0.0
        %925 = vmatpush1.msra.mxu0 0.0
        %926 = vmatprep.subr.mxu0 0.0
        %927 = vmatpush1.msra.mxu0 0.0
        %928 = vmatprep.subr.mxu0 0.0
        %929 = vmatpush1.msra.mxu0 0.0
        %930 = vmatprep.subr.mxu0 0.0
        %931 = vmatpush1.msra.mxu0 0.0
        %932 = vmatprep.subr.mxu0 0.0
        %933 = vmatpush1.msra.mxu0 0.0
        %934 = vmatprep.subr.mxu0 0.0
        %935 = vmatpush1.msra.mxu0 0.0
        %936 = vmatprep.subr.mxu0 0.0
        %937 = vmatpush1.msra.mxu0 0.0
        %938 = vmatprep.subr.mxu0 0.0
        %939 = vmatpush1.msra.mxu0 0.0
        %940 = vmatprep.subr.mxu0 0.0
        %941 = vmatpush1.msra.mxu0 0.0
        %942 = vmatprep.subr.mxu0 0.0
        %943 = vmatpush1.msra.mxu0 0.0
        %944 = vmatprep.subr.mxu0 0.0
        %945 = vmatpush1.msra.mxu0 0.0
        %946 = vmatprep.subr.mxu0 0.0
        %947 = vmatpush1.msra.mxu0 0.0
        %948 = vmatprep.subr.mxu0 0.0
        %949 = vmatpush1.msra.mxu0 0.0
        %950 = vmatprep.subr.mxu0 0.0
        %951 = vmatpush1.msra.mxu0 0.0
        %952 = vmatprep.subr.mxu0 0.0
        %953 = vmatpush1.msra.mxu0 0.0
        %954 = vmatprep.subr.mxu0 0.0
        %955 = vmatpush1.msra.mxu0 0.0
        %956 = vmatprep.mubr.f32.mxu0 0.0
        %v957 = vand.u32 %v732, 4294901760
        %v958 = vsub.f32 %v732, %v957
        %959 = vmatmul.mubr.f32.gmra.mrb[0].mxu0 %v958
        %v960 = vpop.f32.mrb[0].mxu0
        %v961 = vadd.f32 %v887, %v960
        %v962 = vpop.f32.mrb[0].mxu0
        %963 = vdwg.mxu0
        %964 = vmatprep.subr.mxu0 0.0
        %v965 = vand.u32 %v736, 4294901760
        %966 = vmatpush1.msra.mxu0 %v965
        %967 = vmatprep.subr.mxu0 0.0
        %968 = vmatpush1.msra.mxu0 0.0
        %969 = vmatprep.subr.mxu0 0.0
        %970 = vmatpush1.msra.mxu0 0.0
        %971 = vmatprep.subr.mxu0 0.0
        %972 = vmatpush1.msra.mxu0 0.0
        %973 = vmatprep.subr.mxu0 0.0
        %974 = vmatpush1.msra.mxu0 0.0
        %975 = vmatprep.subr.mxu0 0.0
        %976 = vmatpush1.msra.mxu0 0.0
        %977 = vmatprep.subr.mxu0 0.0
        %978 = vmatpush1.msra.mxu0 0.0
        %979 = vmatprep.subr.mxu0 0.0
        %980 = vmatpush1.msra.mxu0 0.0
        %981 = vmatprep.subr.mxu0 0.0
        %982 = vmatpush1.msra.mxu0 0.0
        %983 = vmatprep.subr.mxu0 0.0
        %984 = vmatpush1.msra.mxu0 0.0
        %985 = vmatprep.subr.mxu0 0.0
        %986 = vmatpush1.msra.mxu0 0.0
        %987 = vmatprep.subr.mxu0 0.0
        %988 = vmatpush1.msra.mxu0 0.0
        %989 = vmatprep.subr.mxu0 0.0
        %990 = vmatpush1.msra.mxu0 0.0
        %991 = vmatprep.subr.mxu0 0.0
        %992 = vmatpush1.msra.mxu0 0.0
        %993 = vmatprep.subr.mxu0 0.0
        %994 = vmatpush1.msra.mxu0 0.0
        %995 = vmatprep.subr.mxu0 0.0
        %996 = vmatpush1.msra.mxu0 0.0
        %997 = vmatprep.subr.mxu0 0.0
        %998 = vmatpush1.msra.mxu0 0.0
        %999 = vmatprep.subr.mxu0 0.0
        %1000 = vmatpush1.msra.mxu0 0.0
        %1001 = vmatprep.subr.mxu0 0.0
        %1002 = vmatpush1.msra.mxu0 0.0
        %1003 = vmatprep.subr.mxu0 0.0
        %1004 = vmatpush1.msra.mxu0 0.0
        %1005 = vmatprep.subr.mxu0 0.0
        %1006 = vmatpush1.msra.mxu0 0.0
        %1007 = vmatprep.subr.mxu0 0.0
        %1008 = vmatpush1.msra.mxu0 0.0
        %1009 = vmatprep.subr.mxu0 0.0
        %1010 = vmatpush1.msra.mxu0 0.0
        %1011 = vmatprep.subr.mxu0 0.0
        %1012 = vmatpush1.msra.mxu0 0.0
        %1013 = vmatprep.subr.mxu0 0.0
        %1014 = vmatpush1.msra.mxu0 0.0
        %1015 = vmatprep.subr.mxu0 0.0
        %1016 = vmatpush1.msra.mxu0 0.0
        %1017 = vmatprep.subr.mxu0 0.0
        %1018 = vmatpush1.msra.mxu0 0.0
        %1019 = vmatprep.subr.mxu0 0.0
        %1020 = vmatpush1.msra.mxu0 0.0
        %1021 = vmatprep.subr.mxu0 0.0
        %1022 = vmatpush1.msra.mxu0 0.0
        %1023 = vmatprep.subr.mxu0 0.0
        %1024 = vmatpush1.msra.mxu0 0.0
        %1025 = vmatprep.subr.mxu0 0.0
        %1026 = vmatpush1.msra.mxu0 0.0
        %1027 = vmatprep.subr.mxu0 0.0
        %1028 = vmatpush1.msra.mxu0 0.0
        %1029 = vmatprep.mubr.f32.mxu0 0.0
        %v1030 = vand.u32 %v732, 4294901760
        %v1031 = vsub.f32 %v732, %v1030
        %v1032 = vand.u32 %v1031, 4294901760
        %1033 = vmatmul.mubr.f32.gmra.mrb[0].mxu0 %v1032
        %v1034 = vpop.f32.mrb[0].mxu0
        %v1035 = vadd.f32 %v961, %v1034
        %v1036 = vpop.f32.mrb[0].mxu0
        %1037 = vdwg.mxu0
        %1038 = vmatprep.subr.mxu0 0.0
        %v1039 = vand.u32 %v736, 4294901760
        %v1040 = vsub.f32 %v736, %v1039
        %v1041 = vand.u32 %v1040, 4294901760
        %1042 = vmatpush1.msra.mxu0 %v1041
        %1043 = vmatprep.subr.mxu0 0.0
        %1044 = vmatpush1.msra.mxu0 0.0
        %1045 = vmatprep.subr.mxu0 0.0
        %1046 = vmatpush1.msra.mxu0 0.0
        %1047 = vmatprep.subr.mxu0 0.0
        %1048 = vmatpush1.msra.mxu0 0.0
        %1049 = vmatprep.subr.mxu0 0.0
        %1050 = vmatpush1.msra.mxu0 0.0
        %1051 = vmatprep.subr.mxu0 0.0
        %1052 = vmatpush1.msra.mxu0 0.0
        %1053 = vmatprep.subr.mxu0 0.0
        %1054 = vmatpush1.msra.mxu0 0.0
        %1055 = vmatprep.subr.mxu0 0.0
        %1056 = vmatpush1.msra.mxu0 0.0
        %1057 = vmatprep.subr.mxu0 0.0
        %1058 = vmatpush1.msra.mxu0 0.0
        %1059 = vmatprep.subr.mxu0 0.0
        %1060 = vmatpush1.msra.mxu0 0.0
        %1061 = vmatprep.subr.mxu0 0.0
        %1062 = vmatpush1.msra.mxu0 0.0
        %1063 = vmatprep.subr.mxu0 0.0
        %1064 = vmatpush1.msra.mxu0 0.0
        %1065 = vmatprep.subr.mxu0 0.0
        %1066 = vmatpush1.msra.mxu0 0.0
        %1067 = vmatprep.subr.mxu0 0.0
        %1068 = vmatpush1.msra.mxu0 0.0
        %1069 = vmatprep.subr.mxu0 0.0
        %1070 = vmatpush1.msra.mxu0 0.0
        %1071 = vmatprep.subr.mxu0 0.0
        %1072 = vmatpush1.msra.mxu0 0.0
        %1073 = vmatprep.subr.mxu0 0.0
        %1074 = vmatpush1.msra.mxu0 0.0
        %1075 = vmatprep.subr.mxu0 0.0
        %1076 = vmatpush1.msra.mxu0 0.0
        %1077 = vmatprep.subr.mxu0 0.0
        %1078 = vmatpush1.msra.mxu0 0.0
        %1079 = vmatprep.subr.mxu0 0.0
        %1080 = vmatpush1.msra.mxu0 0.0
        %1081 = vmatprep.subr.mxu0 0.0
        %1082 = vmatpush1.msra.mxu0 0.0
        %1083 = vmatprep.subr.mxu0 0.0
        %1084 = vmatpush1.msra.mxu0 0.0
        %1085 = vmatprep.subr.mxu0 0.0
        %1086 = vmatpush1.msra.mxu0 0.0
        %1087 = vmatprep.subr.mxu0 0.0
        %1088 = vmatpush1.msra.mxu0 0.0
        %1089 = vmatprep.subr.mxu0 0.0
        %1090 = vmatpush1.msra.mxu0 0.0
        %1091 = vmatprep.subr.mxu0 0.0
        %1092 = vmatpush1.msra.mxu0 0.0
        %1093 = vmatprep.subr.mxu0 0.0
        %1094 = vmatpush1.msra.mxu0 0.0
        %1095 = vmatprep.subr.mxu0 0.0
        %1096 = vmatpush1.msra.mxu0 0.0
        %1097 = vmatprep.subr.mxu0 0.0
        %1098 = vmatpush1.msra.mxu0 0.0
        %1099 = vmatprep.subr.mxu0 0.0
        %1100 = vmatpush1.msra.mxu0 0.0
        %1101 = vmatprep.subr.mxu0 0.0
        %1102 = vmatpush1.msra.mxu0 0.0
        %1103 = vmatprep.subr.mxu0 0.0
        %1104 = vmatpush1.msra.mxu0 0.0
        %1105 = vmatprep.mubr.f32.mxu0 0.0
        %v1106 = vand.u32 %v732, 4294901760
        %1107 = vmatmul.mubr.f32.gmra.mrb[0].mxu0 %v1106
        %v1108 = vpop.f32.mrb[0].mxu0
        %v1109 = vadd.f32 %v1035, %v1108
        %v1110 = vpop.f32.mrb[0].mxu0
        %1111 = vdwg.mxu0
        %1112 = vmatprep.subr.mxu0 0.0
        %v1113 = vand.u32 %v736, 4294901760
        %1114 = vmatpush1.msra.mxu0 %v1113
        %1115 = vmatprep.subr.mxu0 0.0
        %1116 = vmatpush1.msra.mxu0 0.0
        %1117 = vmatprep.subr.mxu0 0.0
        %1118 = vmatpush1.msra.mxu0 0.0
        %1119 = vmatprep.subr.mxu0 0.0
        %1120 = vmatpush1.msra.mxu0 0.0
        %1121 = vmatprep.subr.mxu0 0.0
        %1122 = vmatpush1.msra.mxu0 0.0
        %1123 = vmatprep.subr.mxu0 0.0
        %1124 = vmatpush1.msra.mxu0 0.0
        %1125 = vmatprep.subr.mxu0 0.0
        %1126 = vmatpush1.msra.mxu0 0.0
        %1127 = vmatprep.subr.mxu0 0.0
        %1128 = vmatpush1.msra.mxu0 0.0
        %1129 = vmatprep.subr.mxu0 0.0
        %1130 = vmatpush1.msra.mxu0 0.0
        %1131 = vmatprep.subr.mxu0 0.0
        %1132 = vmatpush1.msra.mxu0 0.0
        %1133 = vmatprep.subr.mxu0 0.0
        %1134 = vmatpush1.msra.mxu0 0.0
        %1135 = vmatprep.subr.mxu0 0.0
        %1136 = vmatpush1.msra.mxu0 0.0
        %1137 = vmatprep.subr.mxu0 0.0
        %1138 = vmatpush1.msra.mxu0 0.0
        %1139 = vmatprep.subr.mxu0 0.0
        %1140 = vmatpush1.msra.mxu0 0.0
        %1141 = vmatprep.subr.mxu0 0.0
        %1142 = vmatpush1.msra.mxu0 0.0
        %1143 = vmatprep.subr.mxu0 0.0
        %1144 = vmatpush1.msra.mxu0 0.0
        %1145 = vmatprep.subr.mxu0 0.0
        %1146 = vmatpush1.msra.mxu0 0.0
        %1147 = vmatprep.subr.mxu0 0.0
        %1148 = vmatpush1.msra.mxu0 0.0
        %1149 = vmatprep.subr.mxu0 0.0
        %1150 = vmatpush1.msra.mxu0 0.0
        %1151 = vmatprep.subr.mxu0 0.0
        %1152 = vmatpush1.msra.mxu0 0.0
        %1153 = vmatprep.subr.mxu0 0.0
        %1154 = vmatpush1.msra.mxu0 0.0
        %1155 = vmatprep.subr.mxu0 0.0
        %1156 = vmatpush1.msra.mxu0 0.0
        %1157 = vmatprep.subr.mxu0 0.0
        %1158 = vmatpush1.msra.mxu0 0.0
        %1159 = vmatprep.subr.mxu0 0.0
        %1160 = vmatpush1.msra.mxu0 0.0
        %1161 = vmatprep.subr.mxu0 0.0
        %1162 = vmatpush1.msra.mxu0 0.0
        %1163 = vmatprep.subr.mxu0 0.0
        %1164 = vmatpush1.msra.mxu0 0.0
        %1165 = vmatprep.subr.mxu0 0.0
        %1166 = vmatpush1.msra.mxu0 0.0
        %1167 = vmatprep.subr.mxu0 0.0
        %1168 = vmatpush1.msra.mxu0 0.0
        %1169 = vmatprep.subr.mxu0 0.0
        %1170 = vmatpush1.msra.mxu0 0.0
        %1171 = vmatprep.subr.mxu0 0.0
        %1172 = vmatpush1.msra.mxu0 0.0
        %1173 = vmatprep.subr.mxu0 0.0
        %1174 = vmatpush1.msra.mxu0 0.0
        %1175 = vmatprep.subr.mxu0 0.0
        %1176 = vmatpush1.msra.mxu0 0.0
        %1177 = vmatprep.mubr.f32.mxu0 0.0
        %v1178 = vand.u32 %v732, 4294901760
        %1179 = vmatmul.mubr.f32.gmra.mrb[0].mxu0 %v1178
        %v1180 = vpop.f32.mrb[0].mxu0
        %v1181 = vadd.f32 %v1109, %v1180
        %v1182 = vpop.f32.mrb[0].mxu0
        %1183 = vdwg.mxu0
        %vm1184 = vcmask 523264
        %1185 = vst.msk [vmem:[%s216] sm:$0xff] %vm1184, %v1181
        %s1186 = sand.u32 %s135, 1
        %s1187 = scalar_lea.sflag [#allocation5], %s1186
        %s1188 = sand.u32 %s135, 1
        %s1189 = smul.addr %s1188, 8
        %s1190 = scalar_lea.vmem [#allocation4], %s1189
        // Predicated region
        $region41: #{tpu_custom_call.1} parent=35 // pred_check
          %p1191 = pneg %p145
        $region42: #{tpu_custom_call.1} parent=35 // pred_check_branch
          %1193 = sbr.rel (%p1191) target = $region44
        $region43: #{tpu_custom_call.1} parent=35 // pred_region
          %s1195 = ssub.s32 128, 128
          %1196 = vsyncadd %s1187, %s1195
          %s1197 = sadd.s32 %s24, %s23
          %s1198 = smul.addr %s1197, 128
          %s1199 = scalar_lea.hbm %s4, %s1198
          %s1201 = sshll.u32 %s1190, 4
          %s1202 = int_to_ptr.vmem [resolvable:$true] %s1201
          %1204 = dma.vmem_to_hbm [thread:$0]  %s1202, 128, %s1199, %s1187
        $region44: #{tpu_custom_call.1} parent=35 // pred_fallthru
          _
      $region36: #{tpu_custom_call.1} parent=5 // pred_fallthru
        _
      %p1205 = scmp.le.s32.totalorder 2, %s14
      // Predicated region
      $region45: #{tpu_custom_call.1} parent=5 // pred_check
        %p1206 = pneg %p1205
      $region46: #{tpu_custom_call.1} parent=5 // pred_check_branch
        %1208 = sbr.rel (%p1206) target = $region48
      $region47: #{tpu_custom_call.1} parent=5 // pred_region
        %s1209 = ssub.s32 %s14, 2
        // Predicated region
        $region49: #{tpu_custom_call.1} parent=47 // pred_check
          %p1210 = pneg %p151
        $region50: #{tpu_custom_call.1} parent=47 // pred_check_branch
          %1212 = sbr.rel (%p1210) target = $region52
        $region51: #{tpu_custom_call.1} parent=47 // pred_region
          %s1213 = sand.u32 %s136, 1
          %s1214 = scalar_lea.sflag [#allocation5], %s1213
          %s1215 = sand.u32 %s136, 1
          %s1216 = smul.addr %s1215, 8
          %s1217 = scalar_lea.vmem [#allocation4], %s1216
          %1218 = dma.done %s1214, 128
        $region52: #{tpu_custom_call.1} parent=47 // pred_fallthru
          _
      $region48: #{tpu_custom_call.1} parent=5 // pred_fallthru
        _
    $region6: #{tpu_custom_call.1} parent=1 // loop_footer
      %s18 = sadd.s32 1, %s14
    $region7: #{tpu_custom_call.1} parent=1 // loop_footer_branch
      %13 = sbr.rel target = $region3
    $region8: #{tpu_custom_call.1} parent=1 // loop_exit
      _
    %1219 = vsyncpa [#allocation5], 1
    %s1220 = scalar_lea.sflag [#allocation5], 1
    %1221 = vsyncpa %s1220, 1

</llo_original>
